<compile_context>
chip_gen: v5e
topology: v5e:2x2
jax: 0.10.0
libtpu: 0.0.40
codegen_flags: <defaults>
</compile_context>

<pallas_src>
import jax
import jax.numpy as jnp
from jax.experimental import pallas as pl
from jax.experimental.pallas import tpu as pltpu

# (in, out) per layer, in forward order.
LAYER_DIMS = [(31, 40), (40, 64), (64, 128), (128, 256),
              (256, 128), (128, 32), (32, 8), (8, 1)]

BIAS_PAD = 256   # all 8 bias vectors packed into one (8, 256) f32 operand
TB_MAX = 1024    # max batch tile (sweep 1024-2048; 1024 keeps >=2 tiles for typical large B)


def _round_up(n, m):
    return ((n + m - 1) // m) * m


def mlp_kernel(x_ref, b_ref, w0, w1, w2, w3, w4, w5, w6, w7r, o_ref):
    """Full MLP forward on a (tb, 31) batch tile; weights/biases are VMEM-resident."""
    h = x_ref[...].astype(jnp.bfloat16)          # (tb, 31) bf16 matmul input

    def dense_relu(h, w_ref, layer):
        dout = w_ref.shape[1]
        # bf16 MXU matmul, f32 accumulation; bias-add + ReLU in f32 (safe on v5e),
        # activation handed to the next layer in bf16.
        z = jnp.dot(h, w_ref[...], preferred_element_type=jnp.float32)
        z = z + b_ref[layer:layer + 1, :dout]
        return jnp.maximum(z, 0.0).astype(jnp.bfloat16)

    h = dense_relu(h, w0, 0)   # (tb, 40)
    h = dense_relu(h, w1, 1)   # (tb, 64)
    h = dense_relu(h, w2, 2)   # (tb, 128)
    h = dense_relu(h, w3, 3)   # (tb, 256)
    h = dense_relu(h, w4, 4)   # (tb, 128)
    h = dense_relu(h, w5, 5)   # (tb, 32)
    h = dense_relu(h, w6, 6)   # (tb, 8)

    # fc5 (8 -> 1): VPU multiply + lane reduction, then sigmoid (EUP). Output is (tb, 1) f32.
    z = jnp.sum(h.astype(jnp.float32) * w7r[...], axis=-1, keepdims=True) + b_ref[7:8, 0:1]
    o_ref[...] = jax.nn.sigmoid(z)


def init_params(key):
    """Deterministic init mimicking PyTorch Linear default: U[-1/sqrt(fan_in), 1/sqrt(fan_in)]."""
    params = []
    for (fan_in, fan_out) in LAYER_DIMS:
        key, kw, kb = jax.random.split(key, 3)
        bound = 1.0 / jnp.sqrt(jnp.float32(fan_in))
        w = jax.random.uniform(kw, (fan_in, fan_out), jnp.float32, -bound, bound)  # (in, out)
        b = jax.random.uniform(kb, (fan_out,), jnp.float32, -bound, bound)
        params.append((w, b))
    return params


def prepare_params(params):
    """Pack biases into one (8, 256) f32 operand; weights 0..6 to bf16; fc5 weight as f32 row."""
    b_packed = jnp.zeros((8, BIAS_PAD), jnp.float32)
    for i, (_, b) in enumerate(params):
        b_packed = b_packed.at[i, :b.shape[0]].set(b)

    ws = tuple(w.astype(jnp.bfloat16) for (w, _) in params[:7])   # (in, out) bf16, incl. (31, 40)
    w7_row = params[7][0].reshape(1, 8)                            # fc5 weight (8,1) -> (1,8) f32
    return b_packed, ws, w7_row


@jax.jit
def net_forward(x, kernel_params):
    b_packed, ws, w7_row = kernel_params
    x = x.astype(jnp.float32)
    B = x.shape[0]

    # Batch tile: multiple of 8 (sublane rule), capped at TB_MAX. No wrapper padding;
    # Pallas masks partial blocks on the batch axis.
    tb = min(TB_MAX, _round_up(B, 8))
    num_tiles = pl.cdiv(B, tb)

    in_specs = [
        pl.BlockSpec((tb, 31), lambda i: (i, 0)),              # batch-tiled input (full 31 lanes)
        pl.BlockSpec(b_packed.shape, lambda i: (0, 0)),        # resident packed biases
    ]
    in_specs += [pl.BlockSpec(w.shape, lambda i: (0, 0)) for w in ws]  # resident bf16 weights
    in_specs += [pl.BlockSpec(w7_row.shape, lambda i: (0, 0))]         # resident fc5 row
    out_specs = pl.BlockSpec((tb, 1), lambda i: (i, 0))        # 4 B/row output stream

    flops = 2 * B * sum(di * do for di, do in LAYER_DIMS)
    bytes_accessed = (x.size * 4 + b_packed.size * 4
                      + sum(w.size * 2 for w in ws) + w7_row.size * 4
                      + B * 4)

    out = pl.pallas_call(
        mlp_kernel,
        out_shape=jax.ShapeDtypeStruct((B, 1), jnp.float32),
        grid=(num_tiles,),
        in_specs=in_specs,
        out_specs=out_specs,
        compiler_params=pltpu.CompilerParams(dimension_semantics=("parallel",)),
        cost_estimate=pl.CostEstimate(flops=flops, transcendentals=B,
                                      bytes_accessed=bytes_accessed),
    )(x, b_packed, *ws, w7_row)

    return out   # (B, 1), same shape/semantics as the PyTorch forward


def net_forward_ref(x, kernel_params):
    """Plain-JAX reference with identical numerics (bf16 matmul inputs, f32 accumulation)."""
    b_packed, ws, w7_row = kernel_params
    h = x.astype(jnp.float32).astype(jnp.bfloat16)
    for layer, w in enumerate(ws):
        dout = w.shape[1]
        z = jnp.dot(h, w, preferred_element_type=jnp.float32)
        h = jnp.maximum(z + b_packed[layer:layer + 1, :dout], 0.0).astype(jnp.bfloat16)
    z = jnp.sum(h.astype(jnp.float32) * w7_row, axis=-1, keepdims=True) + b_packed[7:8, 0:1]
    return jax.nn.sigmoid(z)


if __name__ == "__main__":
    key = jax.random.PRNGKey(0)
    key_x, key_p = jax.random.split(key)

    params = init_params(key_p)
    kparams = prepare_params(params)

    # Small batch (single grid tile).
    B = 8
    x = jax.random.normal(key_x, (B, 31), jnp.float32)
    out = net_forward(x, kparams)
    jax.block_until_ready(out)
    ref = net_forward_ref(x, kparams)
    assert out.shape == (B, 1), out.shape
    assert jnp.allclose(out, ref, atol=1e-4, rtol=1e-4), \
        float(jnp.max(jnp.abs(out - ref)))

    # Non-multiple-of-8 batch exercising the partial-block (masked writeback) path.
    B2 = 700
    x2 = jax.random.normal(key_x, (B2, 31), jnp.float32)
    out2 = net_forward(x2, kparams)
    jax.block_until_ready(out2)
    ref2 = net_forward_ref(x2, kparams)
    assert out2.shape == (B2, 1), out2.shape
    assert jnp.allclose(out2, ref2, atol=1e-4, rtol=1e-4), \
        float(jnp.max(jnp.abs(out2 - ref2)))

    print("KERNEL_OK")
</pallas_src>

<mosaic_0001>
module attributes {stable_mosaic.version = 11 : i64} {
  func.func @mlp_kernel(%arg0: i32, %arg1: memref<8x31xf32, #tpu.memory_space<vmem>>, %arg2: memref<8x256xf32, #tpu.memory_space<vmem>>, %arg3: memref<31x40xbf16, #tpu.memory_space<vmem>>, %arg4: memref<40x64xbf16, #tpu.memory_space<vmem>>, %arg5: memref<64x128xbf16, #tpu.memory_space<vmem>>, %arg6: memref<128x256xbf16, #tpu.memory_space<vmem>>, %arg7: memref<256x128xbf16, #tpu.memory_space<vmem>>, %arg8: memref<128x32xbf16, #tpu.memory_space<vmem>>, %arg9: memref<32x8xbf16, #tpu.memory_space<vmem>>, %arg10: memref<1x8xf32, #tpu.memory_space<vmem>>, %arg11: memref<8x1xf32, #tpu.memory_space<vmem>>) attributes {dimension_semantics = [#tpu.dimension_semantics<parallel>], iteration_bounds = array<i64: 1>, scalar_prefetch = 0 : i64, scratch_operands = 0 : i64, tpu.core_type = #tpu.core_type<tc>, window_params = [{transform_indices = @transform_0, window_bounds = array<i64: 8, 31>}, {pipeline_mode = #tpu.pipeline_mode<synchronous>, transform_indices = @transform_1, window_bounds = array<i64: 8, 256>}, {pipeline_mode = #tpu.pipeline_mode<synchronous>, transform_indices = @transform_2, window_bounds = array<i64: 31, 40>}, {pipeline_mode = #tpu.pipeline_mode<synchronous>, transform_indices = @transform_3, window_bounds = array<i64: 40, 64>}, {pipeline_mode = #tpu.pipeline_mode<synchronous>, transform_indices = @transform_4, window_bounds = array<i64: 64, 128>}, {pipeline_mode = #tpu.pipeline_mode<synchronous>, transform_indices = @transform_5, window_bounds = array<i64: 128, 256>}, {pipeline_mode = #tpu.pipeline_mode<synchronous>, transform_indices = @transform_6, window_bounds = array<i64: 256, 128>}, {pipeline_mode = #tpu.pipeline_mode<synchronous>, transform_indices = @transform_7, window_bounds = array<i64: 128, 32>}, {pipeline_mode = #tpu.pipeline_mode<synchronous>, transform_indices = @transform_8, window_bounds = array<i64: 32, 8>}, {pipeline_mode = #tpu.pipeline_mode<synchronous>, transform_indices = @transform_9, window_bounds = array<i64: 1, 8>}, {transform_indices = @transform_10, window_bounds = array<i64: 8, 1>}]} {
    %c0 = arith.constant 0 : index
    %c0_0 = arith.constant 0 : index
    %0 = vector.load %arg1[%c0, %c0_0] : memref<8x31xf32, #tpu.memory_space<vmem>>, vector<8x31xf32>
    %1 = arith.truncf %0 : vector<8x31xf32> to vector<8x31xbf16>
    %c0_1 = arith.constant 0 : index
    %c0_2 = arith.constant 0 : index
    %2 = vector.load %arg3[%c0_1, %c0_2] : memref<31x40xbf16, #tpu.memory_space<vmem>>, vector<31x40xbf16>
    %cst = arith.constant dense<0.000000e+00> : vector<8x40xf32>
    %3 = tpu.matmul %1, %2, %cst {dimension_numbers = #tpu.dot_dimension_numbers<[1], [0], [0], [1], [0, 0, 1, 1], [], []>} : vector<8x31xbf16>, vector<31x40xbf16>, vector<8x40xf32> -> vector<8x40xf32>
    %c0_3 = arith.constant 0 : index
    %c0_4 = arith.constant 0 : index
    %4 = vector.load %arg2[%c0_3, %c0_4] : memref<8x256xf32, #tpu.memory_space<vmem>>, vector<1x40xf32>
    %5 = vector.broadcast %4 : vector<1x40xf32> to vector<8x40xf32>
    %6 = arith.addf %3, %5 : vector<8x40xf32>
    %cst_5 = arith.constant 0.000000e+00 : f32
    %7 = vector.broadcast %cst_5 : f32 to vector<8x40xf32>
    %8 = arith.maximumf %6, %7 : vector<8x40xf32>
    %9 = arith.truncf %8 : vector<8x40xf32> to vector<8x40xbf16>
    %c0_6 = arith.constant 0 : index
    %c0_7 = arith.constant 0 : index
    %10 = vector.load %arg4[%c0_6, %c0_7] : memref<40x64xbf16, #tpu.memory_space<vmem>>, vector<40x64xbf16>
    %cst_8 = arith.constant dense<0.000000e+00> : vector<8x64xf32>
    %11 = tpu.matmul %9, %10, %cst_8 {dimension_numbers = #tpu.dot_dimension_numbers<[1], [0], [0], [1], [0, 0, 1, 1], [], []>} : vector<8x40xbf16>, vector<40x64xbf16>, vector<8x64xf32> -> vector<8x64xf32>
    %c1 = arith.constant 1 : index
    %c0_9 = arith.constant 0 : index
    %12 = vector.load %arg2[%c1, %c0_9] : memref<8x256xf32, #tpu.memory_space<vmem>>, vector<1x64xf32>
    %13 = vector.broadcast %12 : vector<1x64xf32> to vector<8x64xf32>
    %14 = arith.addf %11, %13 : vector<8x64xf32>
    %cst_10 = arith.constant 0.000000e+00 : f32
    %15 = vector.broadcast %cst_10 : f32 to vector<8x64xf32>
    %16 = arith.maximumf %14, %15 : vector<8x64xf32>
    %17 = arith.truncf %16 : vector<8x64xf32> to vector<8x64xbf16>
    %c0_11 = arith.constant 0 : index
    %c0_12 = arith.constant 0 : index
    %18 = vector.load %arg5[%c0_11, %c0_12] : memref<64x128xbf16, #tpu.memory_space<vmem>>, vector<64x128xbf16>
    %cst_13 = arith.constant dense<0.000000e+00> : vector<8x128xf32>
    %19 = tpu.matmul %17, %18, %cst_13 {dimension_numbers = #tpu.dot_dimension_numbers<[1], [0], [0], [1], [0, 0, 1, 1], [], []>} : vector<8x64xbf16>, vector<64x128xbf16>, vector<8x128xf32> -> vector<8x128xf32>
    %c2 = arith.constant 2 : index
    %c0_14 = arith.constant 0 : index
    %20 = vector.load %arg2[%c2, %c0_14] : memref<8x256xf32, #tpu.memory_space<vmem>>, vector<1x128xf32>
    %21 = vector.broadcast %20 : vector<1x128xf32> to vector<8x128xf32>
    %22 = arith.addf %19, %21 : vector<8x128xf32>
    %cst_15 = arith.constant 0.000000e+00 : f32
    %23 = vector.broadcast %cst_15 : f32 to vector<8x128xf32>
    %24 = arith.maximumf %22, %23 : vector<8x128xf32>
    %25 = arith.truncf %24 : vector<8x128xf32> to vector<8x128xbf16>
    %c0_16 = arith.constant 0 : index
    %c0_17 = arith.constant 0 : index
    %26 = vector.load %arg6[%c0_16, %c0_17] : memref<128x256xbf16, #tpu.memory_space<vmem>>, vector<128x256xbf16>
    %cst_18 = arith.constant dense<0.000000e+00> : vector<8x256xf32>
    %27 = tpu.matmul %25, %26, %cst_18 {dimension_numbers = #tpu.dot_dimension_numbers<[1], [0], [0], [1], [0, 0, 1, 1], [], []>} : vector<8x128xbf16>, vector<128x256xbf16>, vector<8x256xf32> -> vector<8x256xf32>
    %c3 = arith.constant 3 : index
    %c0_19 = arith.constant 0 : index
    %28 = vector.load %arg2[%c3, %c0_19] : memref<8x256xf32, #tpu.memory_space<vmem>>, vector<1x256xf32>
    %29 = vector.broadcast %28 : vector<1x256xf32> to vector<8x256xf32>
    %30 = arith.addf %27, %29 : vector<8x256xf32>
    %cst_20 = arith.constant 0.000000e+00 : f32
    %31 = vector.broadcast %cst_20 : f32 to vector<8x256xf32>
    %32 = arith.maximumf %30, %31 : vector<8x256xf32>
    %33 = arith.truncf %32 : vector<8x256xf32> to vector<8x256xbf16>
    %c0_21 = arith.constant 0 : index
    %c0_22 = arith.constant 0 : index
    %34 = vector.load %arg7[%c0_21, %c0_22] : memref<256x128xbf16, #tpu.memory_space<vmem>>, vector<256x128xbf16>
    %cst_23 = arith.constant dense<0.000000e+00> : vector<8x128xf32>
    %35 = tpu.matmul %33, %34, %cst_23 {dimension_numbers = #tpu.dot_dimension_numbers<[1], [0], [0], [1], [0, 0, 1, 1], [], []>} : vector<8x256xbf16>, vector<256x128xbf16>, vector<8x128xf32> -> vector<8x128xf32>
    %c4 = arith.constant 4 : index
    %c0_24 = arith.constant 0 : index
    %36 = vector.load %arg2[%c4, %c0_24] : memref<8x256xf32, #tpu.memory_space<vmem>>, vector<1x128xf32>
    %37 = vector.broadcast %36 : vector<1x128xf32> to vector<8x128xf32>
    %38 = arith.addf %35, %37 : vector<8x128xf32>
    %cst_25 = arith.constant 0.000000e+00 : f32
    %39 = vector.broadcast %cst_25 : f32 to vector<8x128xf32>
    %40 = arith.maximumf %38, %39 : vector<8x128xf32>
    %41 = arith.truncf %40 : vector<8x128xf32> to vector<8x128xbf16>
    %c0_26 = arith.constant 0 : index
    %c0_27 = arith.constant 0 : index
    %42 = vector.load %arg8[%c0_26, %c0_27] : memref<128x32xbf16, #tpu.memory_space<vmem>>, vector<128x32xbf16>
    %cst_28 = arith.constant dense<0.000000e+00> : vector<8x32xf32>
    %43 = tpu.matmul %41, %42, %cst_28 {dimension_numbers = #tpu.dot_dimension_numbers<[1], [0], [0], [1], [0, 0, 1, 1], [], []>} : vector<8x128xbf16>, vector<128x32xbf16>, vector<8x32xf32> -> vector<8x32xf32>
    %c5 = arith.constant 5 : index
    %c0_29 = arith.constant 0 : index
    %44 = vector.load %arg2[%c5, %c0_29] : memref<8x256xf32, #tpu.memory_space<vmem>>, vector<1x32xf32>
    %45 = vector.broadcast %44 : vector<1x32xf32> to vector<8x32xf32>
    %46 = arith.addf %43, %45 : vector<8x32xf32>
    %cst_30 = arith.constant 0.000000e+00 : f32
    %47 = vector.broadcast %cst_30 : f32 to vector<8x32xf32>
    %48 = arith.maximumf %46, %47 : vector<8x32xf32>
    %49 = arith.truncf %48 : vector<8x32xf32> to vector<8x32xbf16>
    %c0_31 = arith.constant 0 : index
    %c0_32 = arith.constant 0 : index
    %50 = vector.load %arg9[%c0_31, %c0_32] : memref<32x8xbf16, #tpu.memory_space<vmem>>, vector<32x8xbf16>
    %cst_33 = arith.constant dense<0.000000e+00> : vector<8x8xf32>
    %51 = tpu.matmul %49, %50, %cst_33 {dimension_numbers = #tpu.dot_dimension_numbers<[1], [0], [0], [1], [0, 0, 1, 1], [], []>} : vector<8x32xbf16>, vector<32x8xbf16>, vector<8x8xf32> -> vector<8x8xf32>
    %c6 = arith.constant 6 : index
    %c0_34 = arith.constant 0 : index
    %52 = vector.load %arg2[%c6, %c0_34] : memref<8x256xf32, #tpu.memory_space<vmem>>, vector<1x8xf32>
    %53 = vector.broadcast %52 : vector<1x8xf32> to vector<8x8xf32>
    %54 = arith.addf %51, %53 : vector<8x8xf32>
    %cst_35 = arith.constant 0.000000e+00 : f32
    %55 = vector.broadcast %cst_35 : f32 to vector<8x8xf32>
    %56 = arith.maximumf %54, %55 : vector<8x8xf32>
    %57 = arith.truncf %56 : vector<8x8xf32> to vector<8x8xbf16>
    %58 = arith.extf %57 : vector<8x8xbf16> to vector<8x8xf32>
    %c0_36 = arith.constant 0 : index
    %c0_37 = arith.constant 0 : index
    %59 = vector.load %arg10[%c0_36, %c0_37] : memref<1x8xf32, #tpu.memory_space<vmem>>, vector<1x8xf32>
    %60 = vector.broadcast %59 : vector<1x8xf32> to vector<8x8xf32>
    %61 = arith.mulf %58, %60 : vector<8x8xf32>
    %cst_38 = arith.constant dense<0.000000e+00> : vector<8xf32>
    %62 = vector.multi_reduction <add>, %61, %cst_38 [1] : vector<8x8xf32> to vector<8xf32>
    %63 = vector.shape_cast %62 : vector<8xf32> to vector<8x1xf32>
    %c7 = arith.constant 7 : index
    %c0_39 = arith.constant 0 : index
    %64 = vector.load %arg2[%c7, %c0_39] : memref<8x256xf32, #tpu.memory_space<vmem>>, vector<1x1xf32>
    %65 = vector.broadcast %64 : vector<1x1xf32> to vector<8x1xf32>
    %66 = arith.addf %63, %65 : vector<8x1xf32>
    %67 = arith.negf %66 : vector<8x1xf32>
    %68 = math.exp %67 : vector<8x1xf32>
    %cst_40 = arith.constant 1.000000e+00 : f32
    %69 = vector.broadcast %cst_40 : f32 to vector<8x1xf32>
    %70 = arith.addf %69, %68 : vector<8x1xf32>
    %71 = arith.divf %69, %70 : vector<8x1xf32>
    %c0_41 = arith.constant 0 : index
    %c0_42 = arith.constant 0 : index
    %72 = vector.load %arg11[%c0_41, %c0_42] : memref<8x1xf32, #tpu.memory_space<vmem>>, vector<8x1xf32>
    tpu.vector_store %arg11[%c0_41, %c0_42], %71 {strides = array<i32>} : memref<8x1xf32, #tpu.memory_space<vmem>>, vector<8x1xf32>,
    return
  }
  func.func @transform_0(%arg0: i32) -> (i32, i32) {
    %c0_i32 = arith.constant 0 : i32
    %c0_i32_0 = arith.constant 0 : i32
    return %arg0, %c0_i32 : i32, i32
  }
  func.func @transform_1(%arg0: i32) -> (i32, i32) {
    %c0_i32 = arith.constant 0 : i32
    %c0_i32_0 = arith.constant 0 : i32
    %c0_i32_1 = arith.constant 0 : i32
    return %c0_i32, %c0_i32_0 : i32, i32
  }
  func.func @transform_2(%arg0: i32) -> (i32, i32) {
    %c0_i32 = arith.constant 0 : i32
    %c0_i32_0 = arith.constant 0 : i32
    %c0_i32_1 = arith.constant 0 : i32
    return %c0_i32, %c0_i32_0 : i32, i32
  }
  func.func @transform_3(%arg0: i32) -> (i32, i32) {
    %c0_i32 = arith.constant 0 : i32
    %c0_i32_0 = arith.constant 0 : i32
    %c0_i32_1 = arith.constant 0 : i32
    return %c0_i32, %c0_i32_0 : i32, i32
  }
  func.func @transform_4(%arg0: i32) -> (i32, i32) {
    %c0_i32 = arith.constant 0 : i32
    %c0_i32_0 = arith.constant 0 : i32
    %c0_i32_1 = arith.constant 0 : i32
    return %c0_i32, %c0_i32_0 : i32, i32
  }
  func.func @transform_5(%arg0: i32) -> (i32, i32) {
    %c0_i32 = arith.constant 0 : i32
    %c0_i32_0 = arith.constant 0 : i32
    %c0_i32_1 = arith.constant 0 : i32
    return %c0_i32, %c0_i32_0 : i32, i32
  }
  func.func @transform_6(%arg0: i32) -> (i32, i32) {
    %c0_i32 = arith.constant 0 : i32
    %c0_i32_0 = arith.constant 0 : i32
    %c0_i32_1 = arith.constant 0 : i32
    return %c0_i32, %c0_i32_0 : i32, i32
  }
  func.func @transform_7(%arg0: i32) -> (i32, i32) {
    %c0_i32 = arith.constant 0 : i32
    %c0_i32_0 = arith.constant 0 : i32
    %c0_i32_1 = arith.constant 0 : i32
    return %c0_i32, %c0_i32_0 : i32, i32
  }
  func.func @transform_8(%arg0: i32) -> (i32, i32) {
    %c0_i32 = arith.constant 0 : i32
    %c0_i32_0 = arith.constant 0 : i32
    %c0_i32_1 = arith.constant 0 : i32
    return %c0_i32, %c0_i32_0 : i32, i32
  }
  func.func @transform_9(%arg0: i32) -> (i32, i32) {
    %c0_i32 = arith.constant 0 : i32
    %c0_i32_0 = arith.constant 0 : i32
    %c0_i32_1 = arith.constant 0 : i32
    return %c0_i32, %c0_i32_0 : i32, i32
  }
  func.func @transform_10(%arg0: i32) -> (i32, i32) {
    %c0_i32 = arith.constant 0 : i32
    %c0_i32_0 = arith.constant 0 : i32
    return %arg0, %c0_i32 : i32, i32
  }
}

</mosaic_0001>

<llo_original>
// kernel: net_forward.1
$region0: #{net_forward.1}
  #allocation0 [shape = 'u32[]', space=smem, size = 0x4, offset = 0x4, fixed_abs, tag = 'smem constant byte address 0x4 - core index']
  #allocation1 [shape = 'u32[72,128]{1,0:T(1,128)}', space=vmem, size = 0x9000, scoped, tag = 'internal scratch']
  %s0 = inlined_call_operand.hbm [shape: f32[8,31], index: 0, kind: input, shape index: {}]
  %s1 = inlined_call_operand.vmem [shape: f32[8,256], index: 1, kind: input, shape index: {}]
  %s2 = inlined_call_operand.vmem [shape: bf16[31,40], index: 2, kind: input, shape index: {}]
  %s3 = inlined_call_operand.vmem [shape: bf16[40,64], index: 3, kind: input, shape index: {}]
  %s4 = inlined_call_operand.vmem [shape: bf16[64,128], index: 4, kind: input, shape index: {}]
  %s5 = inlined_call_operand.hbm [shape: bf16[128,256], index: 5, kind: input, shape index: {}]
  %s6 = inlined_call_operand.hbm [shape: bf16[256,128], index: 6, kind: input, shape index: {}]
  %s7 = inlined_call_operand.vmem [shape: bf16[128,32], index: 7, kind: input, shape index: {}]
  %s8 = inlined_call_operand.vmem [shape: bf16[32,8], index: 8, kind: input, shape index: {}]
  %s9 = inlined_call_operand.vmem [shape: f32[1,8], index: 9, kind: input, shape index: {}]
  %s10 = inlined_call_operand.vmem [shape: f32[8,1], index: 10, kind: output, shape index: {}]
  %s11 = sld [smem:[#allocation0]]
  $region62: #{net_forward.1} parent=0
    _
  %s13 = ssub.s32 1, %s11
  %s14 = scalar_select 0, %s13, %s11
  $region1: #{net_forward.1} parent=0
    #allocation2 [shape = 'u8[4096]{0}', space=vmem, size = 0x1000, scoped, tag = 'input window, operand 0, single buffered']
    #allocation3 [shape = 's32[1]{0}', space=sflag, size = 0x4, scoped, tag = 'scoped memory for net_forward.1']
    #allocation4 [shape = 'u8[65536]{0}', space=vmem, size = 0x10000, scoped, tag = 'input window, operand 5, single buffered']
    #allocation5 [shape = 's32[1]{0}', space=sflag, size = 0x4, scoped, tag = 'scoped memory for net_forward.1']
    #allocation6 [shape = 'u8[65536]{0}', space=vmem, size = 0x10000, scoped, tag = 'input window, operand 6, single buffered']
    %15 = vsyncpa [#allocation3], 0
    %16 = vsyncpa [#allocation5], 0
    // Predicated region
    $region2: #{net_forward.1} parent=1 // pred_check
      _
    $region3: #{net_forward.1} parent=1 // pred_check_branch
      %18 = sbr.rel (0) target = $region5
    $region4: #{net_forward.1} parent=1 // pred_region
      %20 = vsyncadd [#allocation3], 0
      %s22 = sshll.u32 %s0, 4
      %s23 = int_to_ptr.hbm [resolvable:$true] %s22
      %s24 = sshll.u32 [#allocation2], 4
      %s25 = int_to_ptr.vmem [resolvable:$true] %s24
      %27 = dma.hbm_to_vmem [thread:$0]  %s23, 128, %s25, [#allocation3]
    $region5: #{net_forward.1} parent=1 // pred_fallthru
      _
    // Predicated region
    $region6: #{net_forward.1} parent=1 // pred_check
      _
    $region7: #{net_forward.1} parent=1 // pred_check_branch
      %29 = sbr.rel (0) target = $region9
    $region8: #{net_forward.1} parent=1 // pred_region
      _
    $region9: #{net_forward.1} parent=1 // pred_fallthru
      _
    // Predicated region
    $region10: #{net_forward.1} parent=1 // pred_check
      _
    $region11: #{net_forward.1} parent=1 // pred_check_branch
      %31 = sbr.rel (0) target = $region13
    $region12: #{net_forward.1} parent=1 // pred_region
      _
    $region13: #{net_forward.1} parent=1 // pred_fallthru
      _
    // Predicated region
    $region14: #{net_forward.1} parent=1 // pred_check
      _
    $region15: #{net_forward.1} parent=1 // pred_check_branch
      %33 = sbr.rel (0) target = $region17
    $region16: #{net_forward.1} parent=1 // pred_region
      _
    $region17: #{net_forward.1} parent=1 // pred_fallthru
      _
    // Predicated region
    $region18: #{net_forward.1} parent=1 // pred_check
      _
    $region19: #{net_forward.1} parent=1 // pred_check_branch
      %35 = sbr.rel (0) target = $region21
    $region20: #{net_forward.1} parent=1 // pred_region
      _
    $region21: #{net_forward.1} parent=1 // pred_fallthru
      _
    // Predicated region
    $region22: #{net_forward.1} parent=1 // pred_check
      _
    $region23: #{net_forward.1} parent=1 // pred_check_branch
      %37 = sbr.rel (0) target = $region25
    $region24: #{net_forward.1} parent=1 // pred_region
      %39 = vsyncadd [#allocation5], 0
      %s40 = sshll.u32 %s5, 4
      %s41 = int_to_ptr.hbm [resolvable:$true] %s40
      %s42 = sshll.u32 [#allocation4], 4
      %s43 = int_to_ptr.vmem [resolvable:$true] %s42
      %48 = dma.hbm_to_vmem [thread:$0]  %s41, 2048, %s43, [#allocation5], 128, 128, 8
    $region25: #{net_forward.1} parent=1 // pred_fallthru
      _
    // Predicated region
    $region26: #{net_forward.1} parent=1 // pred_check
      _
    $region27: #{net_forward.1} parent=1 // pred_check_branch
      %50 = sbr.rel (0) target = $region29
    $region28: #{net_forward.1} parent=1 // pred_region
      %52 = vsyncadd [#allocation5], 0
      %s53 = sshll.u32 %s6, 4
      %s54 = int_to_ptr.hbm [resolvable:$true] %s53
      %s55 = sshll.u32 [#allocation6], 4
      %s56 = int_to_ptr.vmem [resolvable:$true] %s55
      %61 = dma.hbm_to_vmem [thread:$0]  %s54, 2048, %s56, [#allocation5], 64, 64, 4
    $region29: #{net_forward.1} parent=1 // pred_fallthru
      _
    // Predicated region
    $region30: #{net_forward.1} parent=1 // pred_check
      _
    $region31: #{net_forward.1} parent=1 // pred_check_branch
      %63 = sbr.rel (0) target = $region33
    $region32: #{net_forward.1} parent=1 // pred_region
      _
    $region33: #{net_forward.1} parent=1 // pred_fallthru
      _
    // Predicated region
    $region34: #{net_forward.1} parent=1 // pred_check
      _
    $region35: #{net_forward.1} parent=1 // pred_check_branch
      %65 = sbr.rel (0) target = $region37
    $region36: #{net_forward.1} parent=1 // pred_region
      _
    $region37: #{net_forward.1} parent=1 // pred_fallthru
      _
    // Predicated region
    $region38: #{net_forward.1} parent=1 // pred_check
      _
    $region39: #{net_forward.1} parent=1 // pred_check_branch
      %67 = sbr.rel (0) target = $region41
    $region40: #{net_forward.1} parent=1 // pred_region
      _
    $region41: #{net_forward.1} parent=1 // pred_fallthru
      _
    // Predicated region
    $region42: #{net_forward.1} parent=1 // pred_check
      _
    $region43: #{net_forward.1} parent=1 // pred_check_branch
      %69 = sbr.rel (0) target = $region45
    $region44: #{net_forward.1} parent=1 // pred_region
      %71 = dma.done [#allocation3], 128
    $region45: #{net_forward.1} parent=1 // pred_fallthru
      _
    // Predicated region
    $region46: #{net_forward.1} parent=1 // pred_check
      _
    $region47: #{net_forward.1} parent=1 // pred_check_branch
      %73 = sbr.rel (0) target = $region49
    $region48: #{net_forward.1} parent=1 // pred_region
      %75 = dma.done [#allocation5], 2048
    $region49: #{net_forward.1} parent=1 // pred_fallthru
      _
    // Predicated region
    $region50: #{net_forward.1} parent=1 // pred_check
      _
    $region51: #{net_forward.1} parent=1 // pred_check_branch
      %77 = sbr.rel (0) target = $region53
    $region52: #{net_forward.1} parent=1 // pred_region
      %79 = dma.done [#allocation5], 2048
    $region53: #{net_forward.1} parent=1 // pred_fallthru
      _
    %v81 = vld [vmem:[#allocation2] sm:$0xff]
    %v82 = vpack.c.bf16 %v81, %v81
    %v83 = vld [vmem:[%s2] sm:$0xf]
    %v84 = vld [vmem:[%s2 + $0x4] sm:$0xf]
    %v85 = vld [vmem:[%s2 + $0x8] sm:$0xf]
    %v86 = vld [vmem:[%s2 + $0xc] sm:$0xf]
    %v87 = vld [vmem:[%s1] ss:$0 sm:$0xff]
    %v92 = vunpack.c.l.b16 %v83
    %v93 = vunpack.c.l.b16 %v84
    %v94 = vunpack.c.l.b16 %v85
    %v95 = vunpack.c.l.b16 %v86
    %v96 = vpack.c.b16 %v93, %v92
    %v97 = vpack.c.b16 %v95, %v94
    %vm99 = vcmask 252928
    %v101 = vsel %vm99, %v82, 0
    %vm103 = vcmask 1046528
    %vm104 = vcmask 1047552
    %v105 = vsel %vm103, 4294967295, 65535
    %v106 = vsel %vm104, %v105, 0
    %v108 = vand.u32 %v97, %v106
    %110 = vmatpush.bf16.msra.mxu0 0
    %111 = vmatpush.bf16.msra.mxu0 0
    %112 = vmatpush.bf16.msra.mxu0 0
    %113 = vmatpush.bf16.msra.mxu0 0
    %114 = vmatpush.bf16.msra.mxu0 0
    %115 = vmatpush.bf16.msra.mxu0 0
    %116 = vmatpush.bf16.msra.mxu0 %v108
    %117 = vmatpush.bf16.msra.mxu0 %v96
    %118 = vmatmul.bf16.gmra.mxu0 %v101
    %v119 = vpop.f32.mrf.mxu0
    %v120 = vadd.f32 %v87, %v119
    %v121 = vpop.f32.mrf.mxu0
    %122 = vdwg.mxu0
    %v123 = vmax.f32 %v120, 0.0
    %v124 = vpack.c.bf16 %v123, %v123
    %v125 = vld [vmem:[%s3] sm:$0xf]
    %v126 = vld [vmem:[%s3 + $0x4] sm:$0xf]
    %v127 = vld [vmem:[%s3 + $0x8] sm:$0xf]
    %v128 = vld [vmem:[%s3 + $0xc] sm:$0xf]
    %v129 = vld [vmem:[%s3 + $0x10] sm:$0xf]
    %v130 = vld [vmem:[%s1 + $0x1] ss:$0 sm:$0xff]
    %v136 = vunpack.c.l.b16 %v125
    %v137 = vunpack.c.l.b16 %v126
    %v138 = vunpack.c.l.b16 %v127
    %v139 = vunpack.c.l.b16 %v128
    %v140 = vunpack.c.l.b16 %v129
    %v141 = vpack.c.b16 %v137, %v136
    %v142 = vpack.c.b16 %v139, %v138
    %v143 = vpack.c.b16 %v140, %v140
    %vm146 = vcmask 326656
    %v148 = vsel %vm146, %v124, 0
    %vm150 = vcmask 1043456
    %v152 = vsel %vm150, %v143, 0
    %154 = vmatpush.bf16.msra.mxu0 0
    %155 = vmatpush.bf16.msra.mxu0 0
    %156 = vmatpush.bf16.msra.mxu0 0
    %157 = vmatpush.bf16.msra.mxu0 0
    %158 = vmatpush.bf16.msra.mxu0 0
    %159 = vmatpush.bf16.msra.mxu0 %v152
    %160 = vmatpush.bf16.msra.mxu0 %v142
    %161 = vmatpush.bf16.msra.mxu0 %v141
    %162 = vmatmul.bf16.gmra.mxu0 %v148
    %v163 = vpop.f32.mrf.mxu0
    %v164 = vadd.f32 %v130, %v163
    %v165 = vpop.f32.mrf.mxu0
    %166 = vdwg.mxu0
    %v167 = vmax.f32 %v164, 0.0
    %v168 = vpack.c.bf16 %v167, %v167
    %v169 = vld [vmem:[%s4] sm:$0xf]
    %v170 = vld [vmem:[%s4 + $0x4] sm:$0xf]
    %v171 = vld [vmem:[%s4 + $0x8] sm:$0xf]
    %v172 = vld [vmem:[%s4 + $0xc] sm:$0xf]
    %v173 = vld [vmem:[%s4 + $0x10] sm:$0xf]
    %v174 = vld [vmem:[%s4 + $0x14] sm:$0xf]
    %v175 = vld [vmem:[%s4 + $0x18] sm:$0xf]
    %v176 = vld [vmem:[%s4 + $0x1c] sm:$0xf]
    %v177 = vld [vmem:[%s1 + $0x2] ss:$0 sm:$0xff]
    %v186 = vunpack.c.l.b16 %v169
    %v187 = vunpack.c.l.b16 %v170
    %v188 = vunpack.c.l.b16 %v171
    %v189 = vunpack.c.l.b16 %v172
    %v190 = vunpack.c.l.b16 %v173
    %v191 = vunpack.c.l.b16 %v174
    %v192 = vunpack.c.l.b16 %v175
    %v193 = vunpack.c.l.b16 %v176
    %v194 = vpack.c.b16 %v187, %v186
    %v195 = vpack.c.b16 %v189, %v188
    %v196 = vpack.c.b16 %v191, %v190
    %v197 = vpack.c.b16 %v193, %v192
    %vm202 = vcmask 523264
    %v204 = vsel %vm202, %v168, 0
    %206 = vmatpush.bf16.msra.mxu0 0
    %207 = vmatpush.bf16.msra.mxu0 0
    %208 = vmatpush.bf16.msra.mxu0 0
    %209 = vmatpush.bf16.msra.mxu0 0
    %210 = vmatpush.bf16.msra.mxu0 %v197
    %211 = vmatpush.bf16.msra.mxu0 %v196
    %212 = vmatpush.bf16.msra.mxu0 %v195
    %213 = vmatpush.bf16.msra.mxu0 %v194
    %214 = vmatmul.bf16.gmra.mxu0 %v204
    %v215 = vpop.f32.mrf.mxu0
    %v216 = vadd.f32 %v177, %v215
    %v217 = vpop.f32.mrf.mxu0
    %218 = vdwg.mxu0
    %v219 = vmax.f32 %v216, 0.0
    %v220 = vpack.c.bf16 %v219, %v219
    %v221 = vld [vmem:[#allocation4] sm:$0xff]
    %v222 = vld [vmem:[#allocation4 + $0x8] sm:$0xff]
    %v223 = vld [vmem:[#allocation4 + $0x10] sm:$0xff]
    %v224 = vld [vmem:[#allocation4 + $0x18] sm:$0xff]
    %v225 = vld [vmem:[#allocation4 + $0x20] sm:$0xff]
    %v226 = vld [vmem:[#allocation4 + $0x28] sm:$0xff]
    %v227 = vld [vmem:[#allocation4 + $0x30] sm:$0xff]
    %v228 = vld [vmem:[#allocation4 + $0x38] sm:$0xff]
    %v229 = vld [vmem:[#allocation4 + $0x40] sm:$0xff]
    %v230 = vld [vmem:[#allocation4 + $0x48] sm:$0xff]
    %v231 = vld [vmem:[#allocation4 + $0x50] sm:$0xff]
    %v232 = vld [vmem:[#allocation4 + $0x58] sm:$0xff]
    %v233 = vld [vmem:[#allocation4 + $0x60] sm:$0xff]
    %v234 = vld [vmem:[#allocation4 + $0x68] sm:$0xff]
    %v235 = vld [vmem:[#allocation4 + $0x70] sm:$0xff]
    %v236 = vld [vmem:[#allocation4 + $0x78] sm:$0xff]
    %s237 = scalar_lea.vmem %s1, 3
    %v238 = vld [vmem:[%s237] ss:$8 sm:$0x3]
    %v240 = vperm.slane %v238, 0
    %v241 = vperm.slane %v238, 1
    %v260 = vunpack.c.l.b16 %v221
    %v261 = vunpack.c.h.b16 %v221
    %v262 = vunpack.c.l.b16 %v222
    %v263 = vunpack.c.h.b16 %v222
    %v264 = vunpack.c.l.b16 %v223
    %v265 = vunpack.c.h.b16 %v223
    %v266 = vunpack.c.l.b16 %v224
    %v267 = vunpack.c.h.b16 %v224
    %v268 = vunpack.c.l.b16 %v225
    %v269 = vunpack.c.h.b16 %v225
    %v270 = vunpack.c.l.b16 %v226
    %v271 = vunpack.c.h.b16 %v226
    %v272 = vunpack.c.l.b16 %v227
    %v273 = vunpack.c.h.b16 %v227
    %v274 = vunpack.c.l.b16 %v228
    %v275 = vunpack.c.h.b16 %v228
    %v276 = vunpack.c.l.b16 %v229
    %v277 = vunpack.c.h.b16 %v229
    %v278 = vunpack.c.l.b16 %v230
    %v279 = vunpack.c.h.b16 %v230
    %v280 = vunpack.c.l.b16 %v231
    %v281 = vunpack.c.h.b16 %v231
    %v282 = vunpack.c.l.b16 %v232
    %v283 = vunpack.c.h.b16 %v232
    %v284 = vunpack.c.l.b16 %v233
    %v285 = vunpack.c.h.b16 %v233
    %v286 = vunpack.c.l.b16 %v234
    %v287 = vunpack.c.h.b16 %v234
    %v288 = vunpack.c.l.b16 %v235
    %v289 = vunpack.c.h.b16 %v235
    %v290 = vunpack.c.l.b16 %v236
    %v291 = vunpack.c.h.b16 %v236
    %v292 = vpack.c.b16 %v262, %v260
    %v293 = vpack.c.b16 %v263, %v261
    %v294 = vpack.c.b16 %v266, %v264
    %v295 = vpack.c.b16 %v267, %v265
    %v296 = vpack.c.b16 %v270, %v268
    %v297 = vpack.c.b16 %v271, %v269
    %v298 = vpack.c.b16 %v274, %v272
    %v299 = vpack.c.b16 %v275, %v273
    %v300 = vpack.c.b16 %v278, %v276
    %v301 = vpack.c.b16 %v279, %v277
    %v302 = vpack.c.b16 %v282, %v280
    %v303 = vpack.c.b16 %v283, %v281
    %v304 = vpack.c.b16 %v286, %v284
    %v305 = vpack.c.b16 %v287, %v285
    %v306 = vpack.c.b16 %v290, %v288
    %v307 = vpack.c.b16 %v291, %v289
    %324 = vmatpush.bf16.msra.mxu0 %v306
    %325 = vmatpush.bf16.msra.mxu0 %v304
    %326 = vmatpush.bf16.msra.mxu0 %v302
    %327 = vmatpush.bf16.msra.mxu0 %v300
    %328 = vmatpush.bf16.msra.mxu0 %v298
    %329 = vmatpush.bf16.msra.mxu0 %v296
    %330 = vmatpush.bf16.msra.mxu0 %v294
    %331 = vmatpush.bf16.msra.mxu0 %v292
    %332 = vmatmul.bf16.gmra.mxu0 %v220
    %v333 = vpop.f32.mrf.mxu0
    %v334 = vadd.f32 %v240, %v333
    %v335 = vpop.f32.mrf.mxu0
    %336 = vdwg.mxu0
    %337 = vmatpush.bf16.msra.mxu0 %v307
    %338 = vmatpush.bf16.msra.mxu0 %v305
    %339 = vmatpush.bf16.msra.mxu0 %v303
    %340 = vmatpush.bf16.msra.mxu0 %v301
    %341 = vmatpush.bf16.msra.mxu0 %v299
    %342 = vmatpush.bf16.msra.mxu0 %v297
    %343 = vmatpush.bf16.msra.mxu0 %v295
    %344 = vmatpush.bf16.msra.mxu0 %v293
    %345 = vmatmul.bf16.gmra.mxu0 %v220
    %v346 = vpop.f32.mrf.mxu0
    %v347 = vadd.f32 %v241, %v346
    %v348 = vpop.f32.mrf.mxu0
    %349 = vdwg.mxu0
    %v350 = vmax.f32 %v334, 0.0
    %v351 = vmax.f32 %v347, 0.0
    %v352 = vpack.c.bf16 %v350, %v350
    %v353 = vpack.c.bf16 %v351, %v351
    %v354 = vld [vmem:[#allocation6] sm:$0xf]
    %v355 = vld [vmem:[#allocation6 + $0x4] sm:$0xf]
    %v356 = vld [vmem:[#allocation6 + $0x8] sm:$0xf]
    %v357 = vld [vmem:[#allocation6 + $0xc] sm:$0xf]
    %v358 = vld [vmem:[#allocation6 + $0x10] sm:$0xf]
    %v359 = vld [vmem:[#allocation6 + $0x14] sm:$0xf]
    %v360 = vld [vmem:[#allocation6 + $0x18] sm:$0xf]
    %v361 = vld [vmem:[#allocation6 + $0x1c] sm:$0xf]
    %v362 = vld [vmem:[#allocation6 + $0x20] sm:$0xf]
    %v363 = vld [vmem:[#allocation6 + $0x24] sm:$0xf]
    %v364 = vld [vmem:[#allocation6 + $0x28] sm:$0xf]
    %v365 = vld [vmem:[#allocation6 + $0x2c] sm:$0xf]
    %v366 = vld [vmem:[#allocation6 + $0x30] sm:$0xf]
    %v367 = vld [vmem:[#allocation6 + $0x34] sm:$0xf]
    %v368 = vld [vmem:[#allocation6 + $0x38] sm:$0xf]
    %v369 = vld [vmem:[#allocation6 + $0x3c] sm:$0xf]
    %v370 = vld [vmem:[#allocation6 + $0x40] sm:$0xf]
    %v371 = vld [vmem:[#allocation6 + $0x44] sm:$0xf]
    %v372 = vld [vmem:[#allocation6 + $0x48] sm:$0xf]
    %v373 = vld [vmem:[#allocation6 + $0x4c] sm:$0xf]
    %v374 = vld [vmem:[#allocation6 + $0x50] sm:$0xf]
    %v375 = vld [vmem:[#allocation6 + $0x54] sm:$0xf]
    %v376 = vld [vmem:[#allocation6 + $0x58] sm:$0xf]
    %v377 = vld [vmem:[#allocation6 + $0x5c] sm:$0xf]
    %v378 = vld [vmem:[#allocation6 + $0x60] sm:$0xf]
    %v379 = vld [vmem:[#allocation6 + $0x64] sm:$0xf]
    %v380 = vld [vmem:[#allocation6 + $0x68] sm:$0xf]
    %v381 = vld [vmem:[#allocation6 + $0x6c] sm:$0xf]
    %v382 = vld [vmem:[#allocation6 + $0x70] sm:$0xf]
    %v383 = vld [vmem:[#allocation6 + $0x74] sm:$0xf]
    %v384 = vld [vmem:[#allocation6 + $0x78] sm:$0xf]
    %v385 = vld [vmem:[#allocation6 + $0x7c] sm:$0xf]
    %v386 = vld [vmem:[%s1 + $0x4] ss:$0 sm:$0xff]
    %v419 = vunpack.c.l.b16 %v354
    %v420 = vunpack.c.l.b16 %v355
    %v421 = vunpack.c.l.b16 %v356
    %v422 = vunpack.c.l.b16 %v357
    %v423 = vunpack.c.l.b16 %v358
    %v424 = vunpack.c.l.b16 %v359
    %v425 = vunpack.c.l.b16 %v360
    %v426 = vunpack.c.l.b16 %v361
    %v427 = vunpack.c.l.b16 %v362
    %v428 = vunpack.c.l.b16 %v363
    %v429 = vunpack.c.l.b16 %v364
    %v430 = vunpack.c.l.b16 %v365
    %v431 = vunpack.c.l.b16 %v366
    %v432 = vunpack.c.l.b16 %v367
    %v433 = vunpack.c.l.b16 %v368
    %v434 = vunpack.c.l.b16 %v369
    %v435 = vunpack.c.l.b16 %v370
    %v436 = vunpack.c.l.b16 %v371
    %v437 = vunpack.c.l.b16 %v372
    %v438 = vunpack.c.l.b16 %v373
    %v439 = vunpack.c.l.b16 %v374
    %v440 = vunpack.c.l.b16 %v375
    %v441 = vunpack.c.l.b16 %v376
    %v442 = vunpack.c.l.b16 %v377
    %v443 = vunpack.c.l.b16 %v378
    %v444 = vunpack.c.l.b16 %v379
    %v445 = vunpack.c.l.b16 %v380
    %v446 = vunpack.c.l.b16 %v381
    %v447 = vunpack.c.l.b16 %v382
    %v448 = vunpack.c.l.b16 %v383
    %v449 = vunpack.c.l.b16 %v384
    %v450 = vunpack.c.l.b16 %v385
    %v451 = vpack.c.b16 %v420, %v419
    %v452 = vpack.c.b16 %v422, %v421
    %v453 = vpack.c.b16 %v424, %v423
    %v454 = vpack.c.b16 %v426, %v425
    %v455 = vpack.c.b16 %v428, %v427
    %v456 = vpack.c.b16 %v430, %v429
    %v457 = vpack.c.b16 %v432, %v431
    %v458 = vpack.c.b16 %v434, %v433
    %v459 = vpack.c.b16 %v436, %v435
    %v460 = vpack.c.b16 %v438, %v437
    %v461 = vpack.c.b16 %v440, %v439
    %v462 = vpack.c.b16 %v442, %v441
    %v463 = vpack.c.b16 %v444, %v443
    %v464 = vpack.c.b16 %v446, %v445
    %v465 = vpack.c.b16 %v448, %v447
    %v466 = vpack.c.b16 %v450, %v449
    %483 = vmatpush.bf16.msra.mxu0 %v458
    %484 = vmatpush.bf16.msra.mxu0 %v457
    %485 = vmatpush.bf16.msra.mxu0 %v456
    %486 = vmatpush.bf16.msra.mxu0 %v455
    %487 = vmatpush.bf16.msra.mxu0 %v454
    %488 = vmatpush.bf16.msra.mxu0 %v453
    %489 = vmatpush.bf16.msra.mxu0 %v452
    %490 = vmatpush.bf16.msra.mxu0 %v451
    %491 = vmatmul.bf16.gmra.mxu0 %v352
    %v492 = vpop.f32.mrf.mxu0
    %v493 = vadd.f32 %v386, %v492
    %v494 = vpop.f32.mrf.mxu0
    %495 = vdwg.mxu0
    %496 = vmatpush.bf16.msra.mxu0 %v466
    %497 = vmatpush.bf16.msra.mxu0 %v465
    %498 = vmatpush.bf16.msra.mxu0 %v464
    %499 = vmatpush.bf16.msra.mxu0 %v463
    %500 = vmatpush.bf16.msra.mxu0 %v462
    %501 = vmatpush.bf16.msra.mxu0 %v461
    %502 = vmatpush.bf16.msra.mxu0 %v460
    %503 = vmatpush.bf16.msra.mxu0 %v459
    %504 = vmatmul.bf16.gmra.mxu0 %v353
    %v505 = vpop.f32.mrf.mxu0
    %v506 = vadd.f32 %v493, %v505
    %v507 = vpop.f32.mrf.mxu0
    %508 = vdwg.mxu0
    %v509 = vmax.f32 %v506, 0.0
    %v510 = vpack.c.bf16 %v509, %v509
    %v511 = vld [vmem:[%s7] sm:$0xf]
    %v512 = vld [vmem:[%s7 + $0x4] sm:$0xf]
    %v513 = vld [vmem:[%s7 + $0x8] sm:$0xf]
    %v514 = vld [vmem:[%s7 + $0xc] sm:$0xf]
    %v515 = vld [vmem:[%s7 + $0x10] sm:$0xf]
    %v516 = vld [vmem:[%s7 + $0x14] sm:$0xf]
    %v517 = vld [vmem:[%s7 + $0x18] sm:$0xf]
    %v518 = vld [vmem:[%s7 + $0x1c] sm:$0xf]
    %v519 = vld [vmem:[%s7 + $0x20] sm:$0xf]
    %v520 = vld [vmem:[%s7 + $0x24] sm:$0xf]
    %v521 = vld [vmem:[%s7 + $0x28] sm:$0xf]
    %v522 = vld [vmem:[%s7 + $0x2c] sm:$0xf]
    %v523 = vld [vmem:[%s7 + $0x30] sm:$0xf]
    %v524 = vld [vmem:[%s7 + $0x34] sm:$0xf]
    %v525 = vld [vmem:[%s7 + $0x38] sm:$0xf]
    %v526 = vld [vmem:[%s7 + $0x3c] sm:$0xf]
    %v527 = vld [vmem:[%s1 + $0x5] ss:$0 sm:$0xff]
    %v544 = vunpack.c.l.b16 %v511
    %v545 = vunpack.c.l.b16 %v512
    %v546 = vunpack.c.l.b16 %v513
    %v547 = vunpack.c.l.b16 %v514
    %v548 = vunpack.c.l.b16 %v515
    %v549 = vunpack.c.l.b16 %v516
    %v550 = vunpack.c.l.b16 %v517
    %v551 = vunpack.c.l.b16 %v518
    %v552 = vunpack.c.l.b16 %v519
    %v553 = vunpack.c.l.b16 %v520
    %v554 = vunpack.c.l.b16 %v521
    %v555 = vunpack.c.l.b16 %v522
    %v556 = vunpack.c.l.b16 %v523
    %v557 = vunpack.c.l.b16 %v524
    %v558 = vunpack.c.l.b16 %v525
    %v559 = vunpack.c.l.b16 %v526
    %v560 = vpack.c.b16 %v545, %v544
    %v561 = vpack.c.b16 %v547, %v546
    %v562 = vpack.c.b16 %v549, %v548
    %v563 = vpack.c.b16 %v551, %v550
    %v564 = vpack.c.b16 %v553, %v552
    %v565 = vpack.c.b16 %v555, %v554
    %v566 = vpack.c.b16 %v557, %v556
    %v567 = vpack.c.b16 %v559, %v558
    %576 = vmatpush.bf16.msra.mxu0 %v567
    %577 = vmatpush.bf16.msra.mxu0 %v566
    %578 = vmatpush.bf16.msra.mxu0 %v565
    %579 = vmatpush.bf16.msra.mxu0 %v564
    %580 = vmatpush.bf16.msra.mxu0 %v563
    %581 = vmatpush.bf16.msra.mxu0 %v562
    %582 = vmatpush.bf16.msra.mxu0 %v561
    %583 = vmatpush.bf16.msra.mxu0 %v560
    %584 = vmatmul.bf16.gmra.mxu0 %v510
    %v585 = vpop.f32.mrf.mxu0
    %v586 = vadd.f32 %v527, %v585
    %v587 = vpop.f32.mrf.mxu0
    %588 = vdwg.mxu0
    %v589 = vmax.f32 %v586, 0.0
    %v590 = vpack.c.bf16 %v589, %v589
    %v591 = vld [vmem:[%s8] sm:$0xf]
    %v592 = vld [vmem:[%s8 + $0x4] sm:$0xf]
    %v593 = vld [vmem:[%s8 + $0x8] sm:$0xf]
    %v594 = vld [vmem:[%s8 + $0xc] sm:$0xf]
    %v595 = vld [vmem:[%s1 + $0x6] ss:$0 sm:$0xff]
    %v600 = vunpack.c.l.b16 %v591
    %v601 = vunpack.c.l.b16 %v592
    %v602 = vunpack.c.l.b16 %v593
    %v603 = vunpack.c.l.b16 %v594
    %v604 = vpack.c.b16 %v601, %v600
    %v605 = vpack.c.b16 %v603, %v602
    %vm608 = vcmask 261120
    %v610 = vsel %vm608, %v590, 0
    %612 = vmatpush.bf16.msra.mxu0 0
    %613 = vmatpush.bf16.msra.mxu0 0
    %614 = vmatpush.bf16.msra.mxu0 0
    %615 = vmatpush.bf16.msra.mxu0 0
    %616 = vmatpush.bf16.msra.mxu0 0
    %617 = vmatpush.bf16.msra.mxu0 0
    %618 = vmatpush.bf16.msra.mxu0 %v605
    %619 = vmatpush.bf16.msra.mxu0 %v604
    %620 = vmatmul.bf16.gmra.mxu0 %v610
    %v621 = vpop.f32.mrf.mxu0
    %v622 = vadd.f32 %v595, %v621
    %v623 = vpop.f32.mrf.mxu0
    %624 = vdwg.mxu0
    %v625 = vmax.f32 %v622, 0.0
    %v626 = vpack.c.bf16 %v625, %v625
    %v627 = vunpack.c.l.bf16 %v626
    %v628 = vld [vmem:[%s9] sm:$0x1]
    %v630 = vperm.slane %v628, 0
    %v632 = vmul.f32 %v627, %v630
    %vm633 = vcmask 64512
    %v634 = vsel %vm633, %v632, 0.0
    %635 = vadd.xlane.f32.xlu0 %v634
    %v636 = vpop.xlane.xlu0 %635
    %v637 = vld [vmem:[%s1 + $0x7] ss:$0 sm:$0xff]
    %v638 = vadd.f32 %v636, %v637
    %v639 = vxor.u32 %v638, 2147483648
    %v640 = vmul.f32 %v639, 1.442695
    %v641 = vpow.pop %v640
    %v642 = vadd.f32 %v641, 1.0
    %v643 = vrcp.pop %v642
    %v644 = vmul.f32 %v642, %v643
    %v645 = vsub.f32 1.0, %v644
    %v646 = vmul.f32 %v643, %v645
    %v647 = vadd.f32 %v643, %v646
    %vm648 = vweird.f32 %v642
    %vm649 = vweird.f32 %v643
    %vm650 = vmor %vm648, %vm649
    %v651 = vsel %vm650, %v643, %v647
    %v652 = vand.u32 2147483647, %v642
    %vm653 = vcmp.eq.f32.partialorder %v652, 8.507059e+37
    %v654 = vand.u32 %v642, 2147483648
    %v655 = vor.u32 1.1754944e-38, %v654
    %v656 = vsel %vm653, %v655, %v651
    %v657 = vmul.f32 1.0, %v656
    %vm658 = vcmask 7168
    %659 = vst.msk [vmem:[%s10] sm:$0xff] %vm658, %v657
    // Predicated region
    $region54: #{net_forward.1} parent=1 // pred_check
      _
    $region55: #{net_forward.1} parent=1 // pred_check_branch
      %661 = sbr.rel (0) target = $region57
    $region56: #{net_forward.1} parent=1 // pred_region
      _
    $region57: #{net_forward.1} parent=1 // pred_fallthru
      _
    // Predicated region
    $region58: #{net_forward.1} parent=1 // pred_check
      _
    $region59: #{net_forward.1} parent=1 // pred_check_branch
      %663 = sbr.rel (0) target = $region61
    $region60: #{net_forward.1} parent=1 // pred_region
      _
    $region61: #{net_forward.1} parent=1 // pred_fallthru
      _
    %664 = vsyncpa [#allocation3], 1
    %665 = vsyncpa [#allocation5], 1

</llo_original>
